<compile_context>
chip_gen: v5e
topology: v5e:2x2
jax: 0.10.0
libtpu: 0.0.40
codegen_flags: <defaults>
</compile_context>

<pallas_src>
import functools
from typing import NamedTuple

import jax
import jax.numpy as jnp
from jax.experimental import pallas as pl
from jax.experimental.pallas import tpu as pltpu


def _round_up(v: int, m: int) -> int:
    return ((v + m - 1) // m) * m


def _ceil_div(a: int, b: int) -> int:
    return -(-a // b)


# ---------------------------------------------------------------------------
# Device-aware VMEM budget
# ---------------------------------------------------------------------------
def _physical_vmem_bytes() -> int:
    try:
        info = pltpu.get_tpu_info()
        for attr in ("vmem_capacity_bytes", "vmem_bytes", "vmem_size_bytes"):
            val = getattr(info, attr, None)
            if val:
                return int(val)
    except Exception:
        pass
    return 64 * 1024 * 1024  # conservative fallback (v7x-sized)


def _vmem_limit_bytes() -> int:
    # ~75% of physical per-TC VMEM, capped: v5e/v6e (128 MiB) -> 96 MiB, v7x -> 48 MiB.
    return min((_physical_vmem_bytes() * 3) // 4, 96 * 1024 * 1024)


# ---------------------------------------------------------------------------
# Static tiling plan
# ---------------------------------------------------------------------------
class _Plan(NamedTuple):
    n: int          # true node count
    n_p: int        # padded node count (tm | n_p and tk | n_p)
    tm: int         # aggregation row tile
    tk: int         # aggregation K tile
    ft_tm: int      # feature-transform row tile
    vmem_limit: int


def _make_plan(n: int, vmem_limit: int) -> _Plan:
    if n <= 256:
        # Single tile; full-dim blocks need no node padding at all.
        n_p, tm, tk = n, n, n
    elif n <= 1024:
        # Single K step, >=2 row tiles so a v7x megacore can shard the parallel axis.
        num_rt = 2 if n <= 512 else 4
        tm = _round_up(_ceil_div(n, num_rt), 8)
        n_p = tm * num_rt
        tk = n_p
    else:
        # Large graphs: ~512-1024 row x ~1024-2048 col adj tiles, K innermost.
        tk_target = 2048 if vmem_limit >= 64 * 1024 * 1024 else 1024
        num_k = max(1, _ceil_div(n, tk_target))
        tk = _round_up(_ceil_div(n, num_k), 128)
        n_p = tk * num_k
        tm = tk // 2                  # divides n_p, multiple of 64, gives >=2 row tiles
    ft_tm = n_p if n_p <= 2048 else tk  # feature transform: big row tiles (>=1024)
    return _Plan(n=n, n_p=n_p, tm=tm, tk=tk, ft_tm=ft_tm, vmem_limit=vmem_limit)


def _resident_h_fits(plan: _Plan, c_h: int, c_out: int, acc_bytes: int) -> bool:
    fixed = (2 * plan.tm * plan.tk * 4        # adj tiles (double-buffered)
             + 2 * plan.tm * c_out * 4        # output tiles (double-buffered)
             + acc_bytes
             + (2 << 20))                     # headroom (bias, W2, internal scratch)
    return fixed + 2 * plan.n_p * c_h * 4 <= plan.vmem_limit


# ---------------------------------------------------------------------------
# Kernel bodies
# ---------------------------------------------------------------------------
def _h_slab(adj_ref, h_ref):
    """Current K slab of h: either the streamed block or a slice of resident h."""
    tk = adj_ref.shape[1]
    if h_ref.shape[0] == tk:                       # streamed slab (or single K tile)
        return h_ref[...]
    start = pl.multiple_of(pl.program_id(1) * tk, tk)   # resident h: slice K slab
    return h_ref[pl.ds(start, tk), :]


def _feature_transform_kernel(x_ref, w_ref, h_ref):
    h_ref[...] = jnp.dot(x_ref[...], w_ref[...], preferred_element_type=jnp.float32)


def _agg_relu_w2_kernel(adj_ref, h_ref, b1_ref, w2_ref, h2_ref, acc_ref):
    """Layer 1 aggregation fused with layer 2 transform:
       h2 = relu(adj @ h1 + b1) @ W2   (acc scratch needed: acc width != out width)."""
    k = pl.program_id(1)

    @pl.when(k == 0)
    def _():
        acc_ref[...] = jnp.zeros_like(acc_ref)

    acc_ref[...] += jnp.dot(adj_ref[...], _h_slab(adj_ref, h_ref),
                            preferred_element_type=jnp.float32)

    @pl.when(k == pl.num_programs(1) - 1)
    def _():
        x1 = jnp.maximum(acc_ref[...] + b1_ref[...], 0.0)          # ReLU activation
        h2_ref[...] = jnp.dot(x1, w2_ref[...], preferred_element_type=jnp.float32)


def _agg_relu_kernel(adj_ref, h_ref, b_ref, out_ref):
    """Layer 2 aggregation: out = relu(adj @ h2 + b2), accumulating directly in out_ref
       (output block index is constant across K, so it stays VMEM-resident)."""
    k = pl.program_id(1)

    @pl.when(k == 0)
    def _():
        out_ref[...] = jnp.zeros_like(out_ref)

    out_ref[...] += jnp.dot(adj_ref[...], _h_slab(adj_ref, h_ref),
                            preferred_element_type=jnp.float32)

    @pl.when(k == pl.num_programs(1) - 1)
    def _():
        out_ref[...] = jnp.maximum(out_ref[...] + b_ref[...], 0.0)


# ---------------------------------------------------------------------------
# pallas_call wrappers
# ---------------------------------------------------------------------------
def _feature_transform(x_p, w, plan: _Plan):
    n_p, tm = plan.n_p, plan.ft_tm
    c_in, c_out = x_p.shape[1], w.shape[1]
    return pl.pallas_call(
        _feature_transform_kernel,
        out_shape=jax.ShapeDtypeStruct((n_p, c_out), jnp.float32),
        grid=(n_p // tm,),
        in_specs=[
            pl.BlockSpec((tm, c_in), lambda i: (i, 0)),
            pl.BlockSpec((c_in, c_out), lambda i: (0, 0)),
        ],
        out_specs=pl.BlockSpec((tm, c_out), lambda i: (i, 0)),
        compiler_params=pltpu.CompilerParams(
            dimension_semantics=("parallel",),
            vmem_limit_bytes=plan.vmem_limit,
        ),
    )(x_p, w)


def _h_block_spec(plan: _Plan, c_h: int, resident: bool):
    if resident:
        return pl.BlockSpec((plan.n_p, c_h), lambda i, k: (0, 0))   # DMA'd once, stays VMEM
    return pl.BlockSpec((plan.tk, c_h), lambda i, k: (k, 0))        # streamed K slabs


def _aggregate_layer1(adj_p, h1, b1_2d, w2_p, plan: _Plan):
    n_p, tm, tk = plan.n_p, plan.tm, plan.tk
    c_h, c_o = h1.shape[1], w2_p.shape[1]
    resident = _resident_h_fits(plan, c_h, c_o, acc_bytes=tm * c_h * 4)
    return pl.pallas_call(
        _agg_relu_w2_kernel,
        out_shape=jax.ShapeDtypeStruct((n_p, c_o), jnp.float32),
        grid=(n_p // tm, n_p // tk),
        in_specs=[
            pl.BlockSpec((tm, tk), lambda i, k: (i, k)),     # adj row/K tile
            _h_block_spec(plan, c_h, resident),              # h1 (resident or streamed)
            pl.BlockSpec((1, c_h), lambda i, k: (0, 0)),     # b1
            pl.BlockSpec((c_h, c_o), lambda i, k: (0, 0)),   # W2 (fused epilogue)
        ],
        out_specs=pl.BlockSpec((tm, c_o), lambda i, k: (i, 0)),
        scratch_shapes=[pltpu.VMEM((tm, c_h), jnp.float32)],
        compiler_params=pltpu.CompilerParams(
            dimension_semantics=("parallel", "arbitrary"),
            vmem_limit_bytes=plan.vmem_limit,
        ),
    )(adj_p, h1, b1_2d, w2_p)


def _aggregate_layer2(adj_p, h2, b2_2d, plan: _Plan):
    n_p, tm, tk = plan.n_p, plan.tm, plan.tk
    c_o = h2.shape[1]
    resident = _resident_h_fits(plan, c_o, c_o, acc_bytes=0)
    return pl.pallas_call(
        _agg_relu_kernel,
        out_shape=jax.ShapeDtypeStruct((n_p, c_o), jnp.float32),
        grid=(n_p // tm, n_p // tk),
        in_specs=[
            pl.BlockSpec((tm, tk), lambda i, k: (i, k)),     # adj row/K tile
            _h_block_spec(plan, c_o, resident),              # h2 (resident or streamed)
            pl.BlockSpec((1, c_o), lambda i, k: (0, 0)),     # b2
        ],
        out_specs=pl.BlockSpec((tm, c_o), lambda i, k: (i, 0)),
        compiler_params=pltpu.CompilerParams(
            dimension_semantics=("parallel", "arbitrary"),
            vmem_limit_bytes=plan.vmem_limit,
        ),
    )(adj_p, h2, b2_2d)


# ---------------------------------------------------------------------------
# One-time prep (padding hoisted out of the per-forward path) + forward
# ---------------------------------------------------------------------------
def prepare_gcn(adj, w1, b1, w2, b2, *, adj_dtype=jnp.float32):
    """Pad adjacency / params once.  adj_dtype=jnp.bfloat16 halves adj HBM traffic
    (f32 accumulation is kept in-kernel) but may violate tight tolerances."""
    n = adj.shape[0]
    c_in, c_hid = w1.shape
    c_out = w2.shape[1]
    plan = _make_plan(n, _vmem_limit_bytes())
    n_p = plan.n_p
    c_out_p = _round_up(c_out, 128)   # lane-dense aggregation outputs (h2 / final out)
    # c_in / c_hid are contraction dims: left unpadded (full-dim blocks are legal;
    # padding them only adds zero HBM traffic + zero FLOPs).
    adj_p = jnp.pad(adj.astype(adj_dtype), ((0, n_p - n), (0, n_p - n)))
    w1_p = w1.astype(jnp.float32)
    w2_p = jnp.pad(w2.astype(jnp.float32), ((0, 0), (0, c_out_p - c_out)))
    b1_2d = b1.astype(jnp.float32).reshape(1, c_hid)
    b2_2d = jnp.pad(b2.astype(jnp.float32), (0, c_out_p - c_out)).reshape(1, c_out_p)
    return plan, (adj_p, w1_p, b1_2d, w2_p, b2_2d)


def gcn_forward(x, adj_p, w1_p, b1_2d, w2_p, b2_2d, *, plan: _Plan, c_out: int):
    """relu(adj @ (relu(adj @ (x@W1) + b1) @ W2) + b2), with layer-2's W2 matmul
    fused into the layer-1 aggregation epilogue (x1 never hits HBM)."""
    if x.ndim == 3:
        x = jnp.squeeze(x, axis=0)   # mirror the PyTorch x.dim()==3 path
    x = x.astype(jnp.float32)
    n, n_p = plan.n, plan.n_p
    x_p = jnp.pad(x, ((0, n_p - n), (0, 0)))       # node axis only; cheap

    h1 = _feature_transform(x_p, w1_p, plan)              # x @ W1
    h2 = _aggregate_layer1(adj_p, h1, b1_2d, w2_p, plan)  # relu(adj@h1 + b1) @ W2
    out = _aggregate_layer2(adj_p, h2, b2_2d, plan)       # relu(adj@h2 + b2)
    # Padded rows/lanes are guaranteed zero-contribution (adj padded columns are 0,
    # W2/b2 padded lanes are 0); slice them away.
    return out[:n, :c_out]


def _reference(x, adj, w1, b1, w2, b2):
    if x.ndim == 3:
        x = jnp.squeeze(x, axis=0)
    x1 = jnp.maximum(adj @ (x @ w1) + b1, 0.0)
    x2 = jnp.maximum(adj @ (x1 @ w2) + b2, 0.0)
    return x2


if __name__ == "__main__":
    # Small shapes consistent with the module's forward.
    N = 128
    in_channels, hid_channels, out_channels = 16, 32, 16

    key = jax.random.PRNGKey(0)
    kx, ka, kw1, kb1, kw2, kb2 = jax.random.split(key, 6)

    # Node features (leading singleton dim exercises the squeeze path).
    x = jax.random.normal(kx, (1, N, in_channels), dtype=jnp.float32)

    # Dense symmetric adjacency with self-loops, row-normalized ("edges").
    a = (jax.random.uniform(ka, (N, N)) < 0.05).astype(jnp.float32)
    a = jnp.maximum(a, a.T) + jnp.eye(N, dtype=jnp.float32)
    adj = a / jnp.sum(a, axis=1, keepdims=True)

    # Deterministic parameter init (Glorot-ish scaling), small biases.
    w1 = jax.random.normal(kw1, (in_channels, hid_channels), jnp.float32) / jnp.sqrt(in_channels)
    b1 = jax.random.normal(kb1, (hid_channels,), jnp.float32) * 0.01
    w2 = jax.random.normal(kw2, (hid_channels, out_channels), jnp.float32) / jnp.sqrt(hid_channels)
    b2 = jax.random.normal(kb2, (out_channels,), jnp.float32) * 0.01

    plan, params = prepare_gcn(adj, w1, b1, w2, b2)        # one-time padding / plan
    fwd = jax.jit(functools.partial(gcn_forward, plan=plan, c_out=out_channels))
    out = jax.block_until_ready(fwd(x, *params))

    ref = _reference(x, adj, w1, b1, w2, b2)
    assert out.shape == (N, out_channels)
    assert jnp.allclose(out, ref, atol=1e-4, rtol=1e-4), "mismatch vs reference"

    print("KERNEL_OK")
</pallas_src>

<mosaic_0001>
module attributes {stable_mosaic.version = 11 : i64} {
  func.func @_agg_relu_w2_kernel(%arg0: i32, %arg1: i32, %arg2: memref<128x128xf32, #tpu.memory_space<vmem>>, %arg3: memref<128x32xf32, #tpu.memory_space<vmem>>, %arg4: memref<1x32xf32, #tpu.memory_space<vmem>>, %arg5: memref<32x128xf32, #tpu.memory_space<vmem>>, %arg6: memref<128x128xf32, #tpu.memory_space<vmem>>, %arg7: memref<128x32xf32, #tpu.memory_space<vmem>>) attributes {dimension_semantics = [#tpu.dimension_semantics<parallel>, #tpu.dimension_semantics<arbitrary>], iteration_bounds = array<i64: 1, 1>, scalar_prefetch = 0 : i64, scratch_operands = 1 : i64, tpu.core_type = #tpu.core_type<tc>, window_params = [{transform_indices = @transform_0, window_bounds = array<i64: 128, 128>}, {pipeline_mode = #tpu.pipeline_mode<synchronous>, transform_indices = @transform_1, window_bounds = array<i64: 128, 32>}, {pipeline_mode = #tpu.pipeline_mode<synchronous>, transform_indices = @transform_2, window_bounds = array<i64: 1, 32>}, {pipeline_mode = #tpu.pipeline_mode<synchronous>, transform_indices = @transform_3, window_bounds = array<i64: 32, 128>}, {transform_indices = @transform_4, window_bounds = array<i64: 128, 128>}]} {
    %c0_i32 = arith.constant 0 : i32
    %0 = arith.cmpi eq, %arg1, %c0_i32 : i32
    %1 = arith.extui %0 : i1 to i32
    %c0_i32_0 = arith.constant 0 : i32
    %2 = arith.cmpi ne, %1, %c0_i32_0 : i32
    scf.if %2 {
      %cst_10 = arith.constant 0.000000e+00 : f32
      %12 = vector.broadcast %cst_10 : f32 to vector<128x32xf32>
      %c0_11 = arith.constant 0 : index
      %c0_12 = arith.constant 0 : index
      %13 = vector.load %arg7[%c0_11, %c0_12] : memref<128x32xf32, #tpu.memory_space<vmem>>, vector<128x32xf32>
      tpu.vector_store %arg7[%c0_11, %c0_12], %12 {strides = array<i32>} : memref<128x32xf32, #tpu.memory_space<vmem>>, vector<128x32xf32>,
    } else {
    }
    %c0 = arith.constant 0 : index
    %c0_1 = arith.constant 0 : index
    %3 = vector.load %arg7[%c0, %c0_1] : memref<128x32xf32, #tpu.memory_space<vmem>>, vector<128x32xf32>
    %c0_2 = arith.constant 0 : index
    %c0_3 = arith.constant 0 : index
    %4 = vector.load %arg2[%c0_2, %c0_3] : memref<128x128xf32, #tpu.memory_space<vmem>>, vector<128x128xf32>
    %c0_4 = arith.constant 0 : index
    %c0_5 = arith.constant 0 : index
    %5 = vector.load %arg3[%c0_4, %c0_5] : memref<128x32xf32, #tpu.memory_space<vmem>>, vector<128x32xf32>
    %cst = arith.constant dense<0.000000e+00> : vector<128x32xf32>
    %6 = tpu.matmul %4, %5, %cst {dimension_numbers = #tpu.dot_dimension_numbers<[1], [0], [0], [1], [0, 0, 1, 1], [], []>} : vector<128x128xf32>, vector<128x32xf32>, vector<128x32xf32> -> vector<128x32xf32>
    %7 = arith.addf %3, %6 : vector<128x32xf32>
    %c0_6 = arith.constant 0 : index
    %c0_7 = arith.constant 0 : index
    %8 = vector.load %arg7[%c0_6, %c0_7] : memref<128x32xf32, #tpu.memory_space<vmem>>, vector<128x32xf32>
    tpu.vector_store %arg7[%c0_6, %c0_7], %7 {strides = array<i32>} : memref<128x32xf32, #tpu.memory_space<vmem>>, vector<128x32xf32>,
    %c0_i32_8 = arith.constant 0 : i32
    %9 = arith.cmpi eq, %arg1, %c0_i32_8 : i32
    %10 = arith.extui %9 : i1 to i32
    %c0_i32_9 = arith.constant 0 : i32
    %11 = arith.cmpi ne, %10, %c0_i32_9 : i32
    scf.if %11 {
      %c0_10 = arith.constant 0 : index
      %c0_11 = arith.constant 0 : index
      %12 = vector.load %arg7[%c0_10, %c0_11] : memref<128x32xf32, #tpu.memory_space<vmem>>, vector<128x32xf32>
      %c0_12 = arith.constant 0 : index
      %c0_13 = arith.constant 0 : index
      %13 = vector.load %arg4[%c0_12, %c0_13] : memref<1x32xf32, #tpu.memory_space<vmem>>, vector<1x32xf32>
      %14 = vector.broadcast %13 : vector<1x32xf32> to vector<128x32xf32>
      %15 = arith.addf %12, %14 : vector<128x32xf32>
      %cst_14 = arith.constant 0.000000e+00 : f32
      %16 = vector.broadcast %cst_14 : f32 to vector<128x32xf32>
      %17 = arith.maximumf %15, %16 : vector<128x32xf32>
      %c0_15 = arith.constant 0 : index
      %c0_16 = arith.constant 0 : index
      %18 = vector.load %arg5[%c0_15, %c0_16] : memref<32x128xf32, #tpu.memory_space<vmem>>, vector<32x128xf32>
      %cst_17 = arith.constant dense<0.000000e+00> : vector<128x128xf32>
      %19 = tpu.matmul %17, %18, %cst_17 {dimension_numbers = #tpu.dot_dimension_numbers<[1], [0], [0], [1], [0, 0, 1, 1], [], []>} : vector<128x32xf32>, vector<32x128xf32>, vector<128x128xf32> -> vector<128x128xf32>
      %c0_18 = arith.constant 0 : index
      %c0_19 = arith.constant 0 : index
      %20 = vector.load %arg6[%c0_18, %c0_19] : memref<128x128xf32, #tpu.memory_space<vmem>>, vector<128x128xf32>
      tpu.vector_store %arg6[%c0_18, %c0_19], %19 {strides = array<i32>} : memref<128x128xf32, #tpu.memory_space<vmem>>, vector<128x128xf32>,
    } else {
    }
    return
  }
  func.func @transform_0(%arg0: i32, %arg1: i32) -> (i32, i32) {
    %c0_i32 = arith.constant 0 : i32
    return %arg0, %arg1 : i32, i32
  }
  func.func @transform_1(%arg0: i32, %arg1: i32) -> (i32, i32) {
    %c0_i32 = arith.constant 0 : i32
    %c0_i32_0 = arith.constant 0 : i32
    %c0_i32_1 = arith.constant 0 : i32
    return %c0_i32, %c0_i32_0 : i32, i32
  }
  func.func @transform_2(%arg0: i32, %arg1: i32) -> (i32, i32) {
    %c0_i32 = arith.constant 0 : i32
    %c0_i32_0 = arith.constant 0 : i32
    %c0_i32_1 = arith.constant 0 : i32
    return %c0_i32, %c0_i32_0 : i32, i32
  }
  func.func @transform_3(%arg0: i32, %arg1: i32) -> (i32, i32) {
    %c0_i32 = arith.constant 0 : i32
    %c0_i32_0 = arith.constant 0 : i32
    %c0_i32_1 = arith.constant 0 : i32
    return %c0_i32, %c0_i32_0 : i32, i32
  }
  func.func @transform_4(%arg0: i32, %arg1: i32) -> (i32, i32) {
    %c0_i32 = arith.constant 0 : i32
    %c0_i32_0 = arith.constant 0 : i32
    return %arg0, %c0_i32 : i32, i32
  }
}

module attributes {stable_mosaic.version = 11 : i64} {
  func.func @_feature_transform_kernel(%arg0: i32, %arg1: memref<128x16xf32, #tpu.memory_space<vmem>>, %arg2: memref<16x32xf32, #tpu.memory_space<vmem>>, %arg3: memref<128x32xf32, #tpu.memory_space<vmem>>) attributes {dimension_semantics = [#tpu.dimension_semantics<parallel>], iteration_bounds = array<i64: 1>, scalar_prefetch = 0 : i64, scratch_operands = 0 : i64, tpu.core_type = #tpu.core_type<tc>, window_params = [{transform_indices = @transform_0, window_bounds = array<i64: 128, 16>}, {pipeline_mode = #tpu.pipeline_mode<synchronous>, transform_indices = @transform_1, window_bounds = array<i64: 16, 32>}, {transform_indices = @transform_2, window_bounds = array<i64: 128, 32>}]} {
    %c0 = arith.constant 0 : index
    %c0_0 = arith.constant 0 : index
    %0 = vector.load %arg1[%c0, %c0_0] : memref<128x16xf32, #tpu.memory_space<vmem>>, vector<128x16xf32>
    %c0_1 = arith.constant 0 : index
    %c0_2 = arith.constant 0 : index
    %1 = vector.load %arg2[%c0_1, %c0_2] : memref<16x32xf32, #tpu.memory_space<vmem>>, vector<16x32xf32>
    %cst = arith.constant dense<0.000000e+00> : vector<128x32xf32>
    %2 = tpu.matmul %0, %1, %cst {dimension_numbers = #tpu.dot_dimension_numbers<[1], [0], [0], [1], [0, 0, 1, 1], [], []>} : vector<128x16xf32>, vector<16x32xf32>, vector<128x32xf32> -> vector<128x32xf32>
    %c0_3 = arith.constant 0 : index
    %c0_4 = arith.constant 0 : index
    %3 = vector.load %arg3[%c0_3, %c0_4] : memref<128x32xf32, #tpu.memory_space<vmem>>, vector<128x32xf32>
    tpu.vector_store %arg3[%c0_3, %c0_4], %2 {strides = array<i32>} : memref<128x32xf32, #tpu.memory_space<vmem>>, vector<128x32xf32>,
    return
  }
  func.func @transform_0(%arg0: i32) -> (i32, i32) {
    %c0_i32 = arith.constant 0 : i32
    %c0_i32_0 = arith.constant 0 : i32
    return %arg0, %c0_i32 : i32, i32
  }
  func.func @transform_1(%arg0: i32) -> (i32, i32) {
    %c0_i32 = arith.constant 0 : i32
    %c0_i32_0 = arith.constant 0 : i32
    %c0_i32_1 = arith.constant 0 : i32
    return %c0_i32, %c0_i32_0 : i32, i32
  }
  func.func @transform_2(%arg0: i32) -> (i32, i32) {
    %c0_i32 = arith.constant 0 : i32
    %c0_i32_0 = arith.constant 0 : i32
    return %arg0, %c0_i32 : i32, i32
  }
}

module attributes {stable_mosaic.version = 11 : i64} {
  func.func @_agg_relu_kernel(%arg0: i32, %arg1: i32, %arg2: memref<128x128xf32, #tpu.memory_space<vmem>>, %arg3: memref<128x128xf32, #tpu.memory_space<vmem>>, %arg4: memref<1x128xf32, #tpu.memory_space<vmem>>, %arg5: memref<128x128xf32, #tpu.memory_space<vmem>>) attributes {dimension_semantics = [#tpu.dimension_semantics<parallel>, #tpu.dimension_semantics<arbitrary>], iteration_bounds = array<i64: 1, 1>, scalar_prefetch = 0 : i64, scratch_operands = 0 : i64, tpu.core_type = #tpu.core_type<tc>, window_params = [{transform_indices = @transform_0, window_bounds = array<i64: 128, 128>}, {pipeline_mode = #tpu.pipeline_mode<synchronous>, transform_indices = @transform_1, window_bounds = array<i64: 128, 128>}, {pipeline_mode = #tpu.pipeline_mode<synchronous>, transform_indices = @transform_2, window_bounds = array<i64: 1, 128>}, {transform_indices = @transform_3, window_bounds = array<i64: 128, 128>}]} {
    %c0_i32 = arith.constant 0 : i32
    %0 = arith.cmpi eq, %arg1, %c0_i32 : i32
    %1 = arith.extui %0 : i1 to i32
    %c0_i32_0 = arith.constant 0 : i32
    %2 = arith.cmpi ne, %1, %c0_i32_0 : i32
    scf.if %2 {
      %cst_10 = arith.constant 0.000000e+00 : f32
      %12 = vector.broadcast %cst_10 : f32 to vector<128x128xf32>
      %c0_11 = arith.constant 0 : index
      %c0_12 = arith.constant 0 : index
      %13 = vector.load %arg5[%c0_11, %c0_12] : memref<128x128xf32, #tpu.memory_space<vmem>>, vector<128x128xf32>
      tpu.vector_store %arg5[%c0_11, %c0_12], %12 {strides = array<i32>} : memref<128x128xf32, #tpu.memory_space<vmem>>, vector<128x128xf32>,
    } else {
    }
    %c0 = arith.constant 0 : index
    %c0_1 = arith.constant 0 : index
    %3 = vector.load %arg5[%c0, %c0_1] : memref<128x128xf32, #tpu.memory_space<vmem>>, vector<128x128xf32>
    %c0_2 = arith.constant 0 : index
    %c0_3 = arith.constant 0 : index
    %4 = vector.load %arg2[%c0_2, %c0_3] : memref<128x128xf32, #tpu.memory_space<vmem>>, vector<128x128xf32>
    %c0_4 = arith.constant 0 : index
    %c0_5 = arith.constant 0 : index
    %5 = vector.load %arg3[%c0_4, %c0_5] : memref<128x128xf32, #tpu.memory_space<vmem>>, vector<128x128xf32>
    %cst = arith.constant dense<0.000000e+00> : vector<128x128xf32>
    %6 = tpu.matmul %4, %5, %cst {dimension_numbers = #tpu.dot_dimension_numbers<[1], [0], [0], [1], [0, 0, 1, 1], [], []>} : vector<128x128xf32>, vector<128x128xf32>, vector<128x128xf32> -> vector<128x128xf32>
    %7 = arith.addf %3, %6 : vector<128x128xf32>
    %c0_6 = arith.constant 0 : index
    %c0_7 = arith.constant 0 : index
    %8 = vector.load %arg5[%c0_6, %c0_7] : memref<128x128xf32, #tpu.memory_space<vmem>>, vector<128x128xf32>
    tpu.vector_store %arg5[%c0_6, %c0_7], %7 {strides = array<i32>} : memref<128x128xf32, #tpu.memory_space<vmem>>, vector<128x128xf32>,
    %c0_i32_8 = arith.constant 0 : i32
    %9 = arith.cmpi eq, %arg1, %c0_i32_8 : i32
    %10 = arith.extui %9 : i1 to i32
    %c0_i32_9 = arith.constant 0 : i32
    %11 = arith.cmpi ne, %10, %c0_i32_9 : i32
    scf.if %11 {
      %c0_10 = arith.constant 0 : index
      %c0_11 = arith.constant 0 : index
      %12 = vector.load %arg5[%c0_10, %c0_11] : memref<128x128xf32, #tpu.memory_space<vmem>>, vector<128x128xf32>
      %c0_12 = arith.constant 0 : index
      %c0_13 = arith.constant 0 : index
      %13 = vector.load %arg4[%c0_12, %c0_13] : memref<1x128xf32, #tpu.memory_space<vmem>>, vector<1x128xf32>
      %14 = vector.broadcast %13 : vector<1x128xf32> to vector<128x128xf32>
      %15 = arith.addf %12, %14 : vector<128x128xf32>
      %cst_14 = arith.constant 0.000000e+00 : f32
      %16 = vector.broadcast %cst_14 : f32 to vector<128x128xf32>
      %17 = arith.maximumf %15, %16 : vector<128x128xf32>
      %c0_15 = arith.constant 0 : index
      %c0_16 = arith.constant 0 : index
      %18 = vector.load %arg5[%c0_15, %c0_16] : memref<128x128xf32, #tpu.memory_space<vmem>>, vector<128x128xf32>
      tpu.vector_store %arg5[%c0_15, %c0_16], %17 {strides = array<i32>} : memref<128x128xf32, #tpu.memory_space<vmem>>, vector<128x128xf32>,
    } else {
    }
    return
  }
  func.func @transform_0(%arg0: i32, %arg1: i32) -> (i32, i32) {
    %c0_i32 = arith.constant 0 : i32
    return %arg0, %arg1 : i32, i32
  }
  func.func @transform_1(%arg0: i32, %arg1: i32) -> (i32, i32) {
    %c0_i32 = arith.constant 0 : i32
    %c0_i32_0 = arith.constant 0 : i32
    %c0_i32_1 = arith.constant 0 : i32
    return %c0_i32, %c0_i32_0 : i32, i32
  }
  func.func @transform_2(%arg0: i32, %arg1: i32) -> (i32, i32) {
    %c0_i32 = arith.constant 0 : i32
    %c0_i32_0 = arith.constant 0 : i32
    %c0_i32_1 = arith.constant 0 : i32
    return %c0_i32, %c0_i32_0 : i32, i32
  }
  func.func @transform_3(%arg0: i32, %arg1: i32) -> (i32, i32) {
    %c0_i32 = arith.constant 0 : i32
    %c0_i32_0 = arith.constant 0 : i32
    return %arg0, %c0_i32 : i32, i32
  }
}

</mosaic_0001>

<llo_original>
// kernel: gcn_forward.3
$region0: #{gcn_forward.3}
  #allocation0 [shape = 'u32[]', space=smem, size = 0x4, offset = 0x4, fixed_abs, tag = 'smem constant byte address 0x4 - core index']
  #allocation1 [shape = 'u32[72,128]{1,0:T(1,128)}', space=vmem, size = 0x9000, scoped, tag = 'internal scratch']
  %s0 = inlined_call_operand.vmem [shape: f32[128,16], index: 0, kind: input, shape index: {}]
  %s1 = inlined_call_operand.vmem [shape: f32[16,32], index: 1, kind: input, shape index: {}]
  %s2 = inlined_call_operand.vmem [shape: f32[128,32], index: 2, kind: output, shape index: {}]
  %s3 = sld [smem:[#allocation0]]
  $region18: #{gcn_forward.3} parent=0
    _
  %s5 = ssub.s32 1, %s3
  %s6 = scalar_select 0, %s5, %s3
  // Predicated region
  $region2: #{gcn_forward.3} parent=0 // pred_check
    _
  $region3: #{gcn_forward.3} parent=0 // pred_check_branch
    %8 = sbr.rel (0) target = $region5
  $region4: #{gcn_forward.3} parent=0 // pred_region
    _
  $region5: #{gcn_forward.3} parent=0 // pred_fallthru
    _
  // Predicated region
  $region6: #{gcn_forward.3} parent=0 // pred_check
    _
  $region7: #{gcn_forward.3} parent=0 // pred_check_branch
    %10 = sbr.rel (0) target = $region9
  $region8: #{gcn_forward.3} parent=0 // pred_region
    _
  $region9: #{gcn_forward.3} parent=0 // pred_fallthru
    _
  %v11 = vld [vmem:[%s0] sm:$0xff]
  %v12 = vld [vmem:[%s0 + $0x8] sm:$0xff]
  %v13 = vld [vmem:[%s0 + $0x10] sm:$0xff]
  %v14 = vld [vmem:[%s0 + $0x18] sm:$0xff]
  %v15 = vld [vmem:[%s0 + $0x20] sm:$0xff]
  %v16 = vld [vmem:[%s0 + $0x28] sm:$0xff]
  %v17 = vld [vmem:[%s0 + $0x30] sm:$0xff]
  %v18 = vld [vmem:[%s0 + $0x38] sm:$0xff]
  %v19 = vld [vmem:[%s0 + $0x40] sm:$0xff]
  %v20 = vld [vmem:[%s0 + $0x48] sm:$0xff]
  %v21 = vld [vmem:[%s0 + $0x50] sm:$0xff]
  %v22 = vld [vmem:[%s0 + $0x58] sm:$0xff]
  %v23 = vld [vmem:[%s0 + $0x60] sm:$0xff]
  %v24 = vld [vmem:[%s0 + $0x68] sm:$0xff]
  %v25 = vld [vmem:[%s0 + $0x70] sm:$0xff]
  %v26 = vld [vmem:[%s0 + $0x78] sm:$0xff]
  %v27 = vld [vmem:[%s1] sm:$0xff]
  %v28 = vld [vmem:[%s1 + $0x8] sm:$0xff]
  %vm29 = vcmask 130048
  %v31 = vsel %vm29, %v11, 0
  %v34 = vsel %vm29, %v12, 0
  %v37 = vsel %vm29, %v13, 0
  %v40 = vsel %vm29, %v14, 0
  %v43 = vsel %vm29, %v15, 0
  %v46 = vsel %vm29, %v16, 0
  %v49 = vsel %vm29, %v17, 0
  %v52 = vsel %vm29, %v18, 0
  %v55 = vsel %vm29, %v19, 0
  %v58 = vsel %vm29, %v20, 0
  %v61 = vsel %vm29, %v21, 0
  %v64 = vsel %vm29, %v22, 0
  %v67 = vsel %vm29, %v23, 0
  %v70 = vsel %vm29, %v24, 0
  %v73 = vsel %vm29, %v25, 0
  %v76 = vsel %vm29, %v26, 0
  %78 = vmatpush.msra.mxu0 0.0
  %79 = vmatpush.msra.mxu0 0.0
  %80 = vmatpush.msra.mxu0 0.0
  %81 = vmatpush.msra.mxu0 0.0
  %82 = vmatpush.msra.mxu0 0.0
  %83 = vmatpush.msra.mxu0 0.0
  %84 = vmatpush.msra.mxu0 0.0
  %85 = vmatpush.msra.mxu0 0.0
  %86 = vmatpush.msra.mxu0 0.0
  %87 = vmatpush.msra.mxu0 0.0
  %88 = vmatpush.msra.mxu0 0.0
  %89 = vmatpush.msra.mxu0 0.0
  %90 = vmatpush.msra.mxu0 0.0
  %91 = vmatpush.msra.mxu0 0.0
  %92 = vmatpush.msra.mxu0 %v28
  %93 = vmatpush.msra.mxu0 %v27
  %94 = vmatmul.f32.gmra.mxu0 %v31
  %v95 = vpop.f32.mrf.mxu0
  %v96 = vadd.f32 0.0, %v95
  %97 = vmatmul.f32.gmra.mxu0 %v34
  %v98 = vpop.f32.mrf.mxu0
  %v99 = vadd.f32 0.0, %v98
  %100 = vmatmul.f32.gmra.mxu0 %v37
  %v101 = vpop.f32.mrf.mxu0
  %v102 = vadd.f32 0.0, %v101
  %103 = vmatmul.f32.gmra.mxu0 %v40
  %v104 = vpop.f32.mrf.mxu0
  %v105 = vadd.f32 0.0, %v104
  %106 = vmatmul.f32.gmra.mxu0 %v43
  %v107 = vpop.f32.mrf.mxu0
  %v108 = vadd.f32 0.0, %v107
  %109 = vmatmul.f32.gmra.mxu0 %v46
  %v110 = vpop.f32.mrf.mxu0
  %v111 = vadd.f32 0.0, %v110
  %112 = vmatmul.f32.gmra.mxu0 %v49
  %v113 = vpop.f32.mrf.mxu0
  %v114 = vadd.f32 0.0, %v113
  %115 = vmatmul.f32.gmra.mxu0 %v52
  %v116 = vpop.f32.mrf.mxu0
  %v117 = vadd.f32 0.0, %v116
  %118 = vmatmul.f32.gmra.mxu0 %v55
  %v119 = vpop.f32.mrf.mxu0
  %v120 = vadd.f32 0.0, %v119
  %121 = vmatmul.f32.gmra.mxu0 %v58
  %v122 = vpop.f32.mrf.mxu0
  %v123 = vadd.f32 0.0, %v122
  %124 = vmatmul.f32.gmra.mxu0 %v61
  %v125 = vpop.f32.mrf.mxu0
  %v126 = vadd.f32 0.0, %v125
  %127 = vmatmul.f32.gmra.mxu0 %v64
  %v128 = vpop.f32.mrf.mxu0
  %v129 = vadd.f32 0.0, %v128
  %130 = vmatmul.f32.gmra.mxu0 %v67
  %v131 = vpop.f32.mrf.mxu0
  %v132 = vadd.f32 0.0, %v131
  %133 = vmatmul.f32.gmra.mxu0 %v70
  %v134 = vpop.f32.mrf.mxu0
  %v135 = vadd.f32 0.0, %v134
  %136 = vmatmul.f32.gmra.mxu0 %v73
  %v137 = vpop.f32.mrf.mxu0
  %v138 = vadd.f32 0.0, %v137
  %139 = vmatmul.f32.gmra.mxu0 %v76
  %v140 = vpop.f32.mrf.mxu0
  %v141 = vadd.f32 0.0, %v140
  %142 = vdwg.mxu0
  %vm143 = vcmask 261120
  %144 = vst.msk [vmem:[%s2] sm:$0xff] %vm143, %v96
  %145 = vst.msk [vmem:[%s2 + $0x8] sm:$0xff] %vm143, %v99
  %146 = vst.msk [vmem:[%s2 + $0x10] sm:$0xff] %vm143, %v102
  %147 = vst.msk [vmem:[%s2 + $0x18] sm:$0xff] %vm143, %v105
  %148 = vst.msk [vmem:[%s2 + $0x20] sm:$0xff] %vm143, %v108
  %149 = vst.msk [vmem:[%s2 + $0x28] sm:$0xff] %vm143, %v111
  %150 = vst.msk [vmem:[%s2 + $0x30] sm:$0xff] %vm143, %v114
  %151 = vst.msk [vmem:[%s2 + $0x38] sm:$0xff] %vm143, %v117
  %152 = vst.msk [vmem:[%s2 + $0x40] sm:$0xff] %vm143, %v120
  %153 = vst.msk [vmem:[%s2 + $0x48] sm:$0xff] %vm143, %v123
  %154 = vst.msk [vmem:[%s2 + $0x50] sm:$0xff] %vm143, %v126
  %155 = vst.msk [vmem:[%s2 + $0x58] sm:$0xff] %vm143, %v129
  %156 = vst.msk [vmem:[%s2 + $0x60] sm:$0xff] %vm143, %v132
  %157 = vst.msk [vmem:[%s2 + $0x68] sm:$0xff] %vm143, %v135
  %158 = vst.msk [vmem:[%s2 + $0x70] sm:$0xff] %vm143, %v138
  %159 = vst.msk [vmem:[%s2 + $0x78] sm:$0xff] %vm143, %v141
  // Predicated region
  $region10: #{gcn_forward.3} parent=0 // pred_check
    _
  $region11: #{gcn_forward.3} parent=0 // pred_check_branch
    %161 = sbr.rel (0) target = $region13
  $region12: #{gcn_forward.3} parent=0 // pred_region
    _
  $region13: #{gcn_forward.3} parent=0 // pred_fallthru
    _
  // Predicated region
  $region14: #{gcn_forward.3} parent=0 // pred_check
    _
  $region15: #{gcn_forward.3} parent=0 // pred_check_branch
    %163 = sbr.rel (0) target = $region17
  $region16: #{gcn_forward.3} parent=0 // pred_region
    _
  $region17: #{gcn_forward.3} parent=0 // pred_fallthru
    _

// kernel: gcn_forward.5
$region0: #{gcn_forward.5}
  #allocation0 [shape = 'u32[]', space=smem, size = 0x4, offset = 0x4, fixed_abs, tag = 'smem constant byte address 0x4 - core index']
  #allocation1 [shape = 'u32[72,128]{1,0:T(1,128)}', space=vmem, size = 0x9000, scoped, tag = 'internal scratch']
  %s0 = inlined_call_operand.vmem [shape: f32[128,128], index: 0, kind: input, shape index: {}]
  %s1 = inlined_call_operand.vmem [shape: f32[128,128], index: 1, kind: input, shape index: {}]
  %s2 = inlined_call_operand.vmem [shape: f32[1,128], index: 2, kind: input, shape index: {}]
  %s3 = inlined_call_operand.vmem [shape: f32[128,128], index: 3, kind: output, shape index: {}]
  %s4 = sld [smem:[#allocation0]]
  $region30: #{gcn_forward.5} parent=0
    _
  %s6 = ssub.s32 1, %s4
  %s7 = scalar_select 0, %s6, %s4
  // Predicated region
  $region2: #{gcn_forward.5} parent=0 // pred_check
    _
  $region3: #{gcn_forward.5} parent=0 // pred_check_branch
    %9 = sbr.rel (0) target = $region5
  $region4: #{gcn_forward.5} parent=0 // pred_region
    _
  $region5: #{gcn_forward.5} parent=0 // pred_fallthru
    _
  // Predicated region
  $region6: #{gcn_forward.5} parent=0 // pred_check
    _
  $region7: #{gcn_forward.5} parent=0 // pred_check_branch
    %11 = sbr.rel (0) target = $region9
  $region8: #{gcn_forward.5} parent=0 // pred_region
    _
  $region9: #{gcn_forward.5} parent=0 // pred_fallthru
    _
  // Predicated region
  $region10: #{gcn_forward.5} parent=0 // pred_check
    _
  $region11: #{gcn_forward.5} parent=0 // pred_check_branch
    %13 = sbr.rel (0) target = $region13
  $region12: #{gcn_forward.5} parent=0 // pred_region
    _
  $region13: #{gcn_forward.5} parent=0 // pred_fallthru
    _
  %p14 = scmp.eq.s32.totalorder 0, 0
  // Predicated region
  $region14: #{gcn_forward.5} parent=0 // pred_check
    %p15 = pneg %p14
  $region15: #{gcn_forward.5} parent=0 // pred_check_branch
    %17 = sbr.rel (%p15) target = $region17
  $region16: #{gcn_forward.5} parent=0 // pred_region
    %18 = vst [vmem:[%s3] sm:$0xff] 0.0
    %19 = vst [vmem:[%s3 + $0x8] sm:$0xff] 0.0
    %20 = vst [vmem:[%s3 + $0x10] sm:$0xff] 0.0
    %21 = vst [vmem:[%s3 + $0x18] sm:$0xff] 0.0
    %22 = vst [vmem:[%s3 + $0x20] sm:$0xff] 0.0
    %23 = vst [vmem:[%s3 + $0x28] sm:$0xff] 0.0
    %24 = vst [vmem:[%s3 + $0x30] sm:$0xff] 0.0
    %25 = vst [vmem:[%s3 + $0x38] sm:$0xff] 0.0
    %26 = vst [vmem:[%s3 + $0x40] sm:$0xff] 0.0
    %27 = vst [vmem:[%s3 + $0x48] sm:$0xff] 0.0
    %28 = vst [vmem:[%s3 + $0x50] sm:$0xff] 0.0
    %29 = vst [vmem:[%s3 + $0x58] sm:$0xff] 0.0
    %30 = vst [vmem:[%s3 + $0x60] sm:$0xff] 0.0
    %31 = vst [vmem:[%s3 + $0x68] sm:$0xff] 0.0
    %32 = vst [vmem:[%s3 + $0x70] sm:$0xff] 0.0
    %33 = vst [vmem:[%s3 + $0x78] sm:$0xff] 0.0
  $region17: #{gcn_forward.5} parent=0 // pred_fallthru
    _
  %v34 = vld [vmem:[%s3] sm:$0xff]
  %v35 = vld [vmem:[%s3 + $0x8] sm:$0xff]
  %v36 = vld [vmem:[%s3 + $0x10] sm:$0xff]
  %v37 = vld [vmem:[%s3 + $0x18] sm:$0xff]
  %v38 = vld [vmem:[%s3 + $0x20] sm:$0xff]
  %v39 = vld [vmem:[%s3 + $0x28] sm:$0xff]
  %v40 = vld [vmem:[%s3 + $0x30] sm:$0xff]
  %v41 = vld [vmem:[%s3 + $0x38] sm:$0xff]
  %v42 = vld [vmem:[%s3 + $0x40] sm:$0xff]
  %v43 = vld [vmem:[%s3 + $0x48] sm:$0xff]
  %v44 = vld [vmem:[%s3 + $0x50] sm:$0xff]
  %v45 = vld [vmem:[%s3 + $0x58] sm:$0xff]
  %v46 = vld [vmem:[%s3 + $0x60] sm:$0xff]
  %v47 = vld [vmem:[%s3 + $0x68] sm:$0xff]
  %v48 = vld [vmem:[%s3 + $0x70] sm:$0xff]
  %v49 = vld [vmem:[%s3 + $0x78] sm:$0xff]
  %v50 = vld [vmem:[%s0] sm:$0xff]
  %v51 = vld [vmem:[%s0 + $0x8] sm:$0xff]
  %v52 = vld [vmem:[%s0 + $0x10] sm:$0xff]
  %v53 = vld [vmem:[%s0 + $0x18] sm:$0xff]
  %v54 = vld [vmem:[%s0 + $0x20] sm:$0xff]
  %v55 = vld [vmem:[%s0 + $0x28] sm:$0xff]
  %v56 = vld [vmem:[%s0 + $0x30] sm:$0xff]
  %v57 = vld [vmem:[%s0 + $0x38] sm:$0xff]
  %v58 = vld [vmem:[%s0 + $0x40] sm:$0xff]
  %v59 = vld [vmem:[%s0 + $0x48] sm:$0xff]
  %v60 = vld [vmem:[%s0 + $0x50] sm:$0xff]
  %v61 = vld [vmem:[%s0 + $0x58] sm:$0xff]
  %v62 = vld [vmem:[%s0 + $0x60] sm:$0xff]
  %v63 = vld [vmem:[%s0 + $0x68] sm:$0xff]
  %v64 = vld [vmem:[%s0 + $0x70] sm:$0xff]
  %v65 = vld [vmem:[%s0 + $0x78] sm:$0xff]
  %v66 = vld [vmem:[%s1] sm:$0xff]
  %v67 = vld [vmem:[%s1 + $0x8] sm:$0xff]
  %v68 = vld [vmem:[%s1 + $0x10] sm:$0xff]
  %v69 = vld [vmem:[%s1 + $0x18] sm:$0xff]
  %v70 = vld [vmem:[%s1 + $0x20] sm:$0xff]
  %v71 = vld [vmem:[%s1 + $0x28] sm:$0xff]
  %v72 = vld [vmem:[%s1 + $0x30] sm:$0xff]
  %v73 = vld [vmem:[%s1 + $0x38] sm:$0xff]
  %v74 = vld [vmem:[%s1 + $0x40] sm:$0xff]
  %v75 = vld [vmem:[%s1 + $0x48] sm:$0xff]
  %v76 = vld [vmem:[%s1 + $0x50] sm:$0xff]
  %v77 = vld [vmem:[%s1 + $0x58] sm:$0xff]
  %v78 = vld [vmem:[%s1 + $0x60] sm:$0xff]
  %v79 = vld [vmem:[%s1 + $0x68] sm:$0xff]
  %v80 = vld [vmem:[%s1 + $0x70] sm:$0xff]
  %v81 = vld [vmem:[%s1 + $0x78] sm:$0xff]
  %82 = vmatpush.msra.mxu0 %v81
  %83 = vmatpush.msra.mxu0 %v80
  %84 = vmatpush.msra.mxu0 %v79
  %85 = vmatpush.msra.mxu0 %v78
  %86 = vmatpush.msra.mxu0 %v77
  %87 = vmatpush.msra.mxu0 %v76
  %88 = vmatpush.msra.mxu0 %v75
  %89 = vmatpush.msra.mxu0 %v74
  %90 = vmatpush.msra.mxu0 %v73
  %91 = vmatpush.msra.mxu0 %v72
  %92 = vmatpush.msra.mxu0 %v71
  %93 = vmatpush.msra.mxu0 %v70
  %94 = vmatpush.msra.mxu0 %v69
  %95 = vmatpush.msra.mxu0 %v68
  %96 = vmatpush.msra.mxu0 %v67
  %97 = vmatpush.msra.mxu0 %v66
  %98 = vmatmul.f32.gmra.mxu0 %v50
  %v99 = vpop.f32.mrf.mxu0
  %v100 = vadd.f32 0.0, %v99
  %101 = vmatmul.f32.gmra.mxu0 %v51
  %v102 = vpop.f32.mrf.mxu0
  %v103 = vadd.f32 0.0, %v102
  %104 = vmatmul.f32.gmra.mxu0 %v52
  %v105 = vpop.f32.mrf.mxu0
  %v106 = vadd.f32 0.0, %v105
  %107 = vmatmul.f32.gmra.mxu0 %v53
  %v108 = vpop.f32.mrf.mxu0
  %v109 = vadd.f32 0.0, %v108
  %110 = vmatmul.f32.gmra.mxu0 %v54
  %v111 = vpop.f32.mrf.mxu0
  %v112 = vadd.f32 0.0, %v111
  %113 = vmatmul.f32.gmra.mxu0 %v55
  %v114 = vpop.f32.mrf.mxu0
  %v115 = vadd.f32 0.0, %v114
  %116 = vmatmul.f32.gmra.mxu0 %v56
  %v117 = vpop.f32.mrf.mxu0
  %v118 = vadd.f32 0.0, %v117
  %119 = vmatmul.f32.gmra.mxu0 %v57
  %v120 = vpop.f32.mrf.mxu0
  %v121 = vadd.f32 0.0, %v120
  %122 = vmatmul.f32.gmra.mxu0 %v58
  %v123 = vpop.f32.mrf.mxu0
  %v124 = vadd.f32 0.0, %v123
  %125 = vmatmul.f32.gmra.mxu0 %v59
  %v126 = vpop.f32.mrf.mxu0
  %v127 = vadd.f32 0.0, %v126
  %128 = vmatmul.f32.gmra.mxu0 %v60
  %v129 = vpop.f32.mrf.mxu0
  %v130 = vadd.f32 0.0, %v129
  %131 = vmatmul.f32.gmra.mxu0 %v61
  %v132 = vpop.f32.mrf.mxu0
  %v133 = vadd.f32 0.0, %v132
  %134 = vmatmul.f32.gmra.mxu0 %v62
  %v135 = vpop.f32.mrf.mxu0
  %v136 = vadd.f32 0.0, %v135
  %137 = vmatmul.f32.gmra.mxu0 %v63
  %v138 = vpop.f32.mrf.mxu0
  %v139 = vadd.f32 0.0, %v138
  %140 = vmatmul.f32.gmra.mxu0 %v64
  %v141 = vpop.f32.mrf.mxu0
  %v142 = vadd.f32 0.0, %v141
  %143 = vmatmul.f32.gmra.mxu0 %v65
  %v144 = vpop.f32.mrf.mxu0
  %v145 = vadd.f32 0.0, %v144
  %146 = vdwg.mxu0
  %v147 = vadd.f32 %v34, %v100
  %v148 = vadd.f32 %v35, %v103
  %v149 = vadd.f32 %v36, %v106
  %v150 = vadd.f32 %v37, %v109
  %v151 = vadd.f32 %v38, %v112
  %v152 = vadd.f32 %v39, %v115
  %v153 = vadd.f32 %v40, %v118
  %v154 = vadd.f32 %v41, %v121
  %v155 = vadd.f32 %v42, %v124
  %v156 = vadd.f32 %v43, %v127
  %v157 = vadd.f32 %v44, %v130
  %v158 = vadd.f32 %v45, %v133
  %v159 = vadd.f32 %v46, %v136
  %v160 = vadd.f32 %v47, %v139
  %v161 = vadd.f32 %v48, %v142
  %v162 = vadd.f32 %v49, %v145
  %163 = vst [vmem:[%s3] sm:$0xff] %v147
  %164 = vst [vmem:[%s3 + $0x8] sm:$0xff] %v148
  %165 = vst [vmem:[%s3 + $0x10] sm:$0xff] %v149
  %166 = vst [vmem:[%s3 + $0x18] sm:$0xff] %v150
  %167 = vst [vmem:[%s3 + $0x20] sm:$0xff] %v151
  %168 = vst [vmem:[%s3 + $0x28] sm:$0xff] %v152
  %169 = vst [vmem:[%s3 + $0x30] sm:$0xff] %v153
  %170 = vst [vmem:[%s3 + $0x38] sm:$0xff] %v154
  %171 = vst [vmem:[%s3 + $0x40] sm:$0xff] %v155
  %172 = vst [vmem:[%s3 + $0x48] sm:$0xff] %v156
  %173 = vst [vmem:[%s3 + $0x50] sm:$0xff] %v157
  %174 = vst [vmem:[%s3 + $0x58] sm:$0xff] %v158
  %175 = vst [vmem:[%s3 + $0x60] sm:$0xff] %v159
  %176 = vst [vmem:[%s3 + $0x68] sm:$0xff] %v160
  %177 = vst [vmem:[%s3 + $0x70] sm:$0xff] %v161
  %178 = vst [vmem:[%s3 + $0x78] sm:$0xff] %v162
  // Predicated region
  $region18: #{gcn_forward.5} parent=0 // pred_check
    %p179 = pneg %p14
  $region19: #{gcn_forward.5} parent=0 // pred_check_branch
    %181 = sbr.rel (%p179) target = $region21
  $region20: #{gcn_forward.5} parent=0 // pred_region
    %v182 = vld [vmem:[%s3] sm:$0xff]
    %v183 = vld [vmem:[%s3 + $0x8] sm:$0xff]
    %v184 = vld [vmem:[%s3 + $0x10] sm:$0xff]
    %v185 = vld [vmem:[%s3 + $0x18] sm:$0xff]
    %v186 = vld [vmem:[%s3 + $0x20] sm:$0xff]
    %v187 = vld [vmem:[%s3 + $0x28] sm:$0xff]
    %v188 = vld [vmem:[%s3 + $0x30] sm:$0xff]
    %v189 = vld [vmem:[%s3 + $0x38] sm:$0xff]
    %v190 = vld [vmem:[%s3 + $0x40] sm:$0xff]
    %v191 = vld [vmem:[%s3 + $0x48] sm:$0xff]
    %v192 = vld [vmem:[%s3 + $0x50] sm:$0xff]
    %v193 = vld [vmem:[%s3 + $0x58] sm:$0xff]
    %v194 = vld [vmem:[%s3 + $0x60] sm:$0xff]
    %v195 = vld [vmem:[%s3 + $0x68] sm:$0xff]
    %v196 = vld [vmem:[%s3 + $0x70] sm:$0xff]
    %v197 = vld [vmem:[%s3 + $0x78] sm:$0xff]
    %v198 = vld [vmem:[%s2] sm:$0x1]
    %v200 = vperm.slane %v198, 0
    %v202 = vadd.f32 %v182, %v200
    %v203 = vadd.f32 %v183, %v200
    %v204 = vadd.f32 %v184, %v200
    %v205 = vadd.f32 %v185, %v200
    %v206 = vadd.f32 %v186, %v200
    %v207 = vadd.f32 %v187, %v200
    %v208 = vadd.f32 %v188, %v200
    %v209 = vadd.f32 %v189, %v200
    %v210 = vadd.f32 %v190, %v200
    %v211 = vadd.f32 %v191, %v200
    %v212 = vadd.f32 %v192, %v200
    %v213 = vadd.f32 %v193, %v200
    %v214 = vadd.f32 %v194, %v200
    %v215 = vadd.f32 %v195, %v200
    %v216 = vadd.f32 %v196, %v200
    %v217 = vadd.f32 %v197, %v200
    %v218 = vmax.f32 %v202, 0.0
    %v219 = vmax.f32 %v203, 0.0
    %v220 = vmax.f32 %v204, 0.0
    %v221 = vmax.f32 %v205, 0.0
    %v222 = vmax.f32 %v206, 0.0
    %v223 = vmax.f32 %v207, 0.0
    %v224 = vmax.f32 %v208, 0.0
    %v225 = vmax.f32 %v209, 0.0
    %v226 = vmax.f32 %v210, 0.0
    %v227 = vmax.f32 %v211, 0.0
    %v228 = vmax.f32 %v212, 0.0
    %v229 = vmax.f32 %v213, 0.0
    %v230 = vmax.f32 %v214, 0.0
    %v231 = vmax.f32 %v215, 0.0
    %v232 = vmax.f32 %v216, 0.0
    %v233 = vmax.f32 %v217, 0.0
    %234 = vst [vmem:[%s3] sm:$0xff] %v218
    %235 = vst [vmem:[%s3 + $0x8] sm:$0xff] %v219
    %236 = vst [vmem:[%s3 + $0x10] sm:$0xff] %v220
    %237 = vst [vmem:[%s3 + $0x18] sm:$0xff] %v221
    %238 = vst [vmem:[%s3 + $0x20] sm:$0xff] %v222
    %239 = vst [vmem:[%s3 + $0x28] sm:$0xff] %v223
    %240 = vst [vmem:[%s3 + $0x30] sm:$0xff] %v224
    %241 = vst [vmem:[%s3 + $0x38] sm:$0xff] %v225
    %242 = vst [vmem:[%s3 + $0x40] sm:$0xff] %v226
    %243 = vst [vmem:[%s3 + $0x48] sm:$0xff] %v227
    %244 = vst [vmem:[%s3 + $0x50] sm:$0xff] %v228
    %245 = vst [vmem:[%s3 + $0x58] sm:$0xff] %v229
    %246 = vst [vmem:[%s3 + $0x60] sm:$0xff] %v230
    %247 = vst [vmem:[%s3 + $0x68] sm:$0xff] %v231
    %248 = vst [vmem:[%s3 + $0x70] sm:$0xff] %v232
    %249 = vst [vmem:[%s3 + $0x78] sm:$0xff] %v233
  $region21: #{gcn_forward.5} parent=0 // pred_fallthru
    _
  // Predicated region
  $region22: #{gcn_forward.5} parent=0 // pred_check
    _
  $region23: #{gcn_forward.5} parent=0 // pred_check_branch
    %251 = sbr.rel (0) target = $region25
  $region24: #{gcn_forward.5} parent=0 // pred_region
    _
  $region25: #{gcn_forward.5} parent=0 // pred_fallthru
    _
  // Predicated region
  $region26: #{gcn_forward.5} parent=0 // pred_check
    _
  $region27: #{gcn_forward.5} parent=0 // pred_check_branch
    %253 = sbr.rel (0) target = $region29
  $region28: #{gcn_forward.5} parent=0 // pred_region
    _
  $region29: #{gcn_forward.5} parent=0 // pred_fallthru
    _

// kernel: gcn_forward.4
$region0: #{gcn_forward.4}
  #allocation0 [shape = 'u32[]', space=smem, size = 0x4, offset = 0x4, fixed_abs, tag = 'smem constant byte address 0x4 - core index']
  #allocation1 [shape = 'u32[72,128]{1,0:T(1,128)}', space=vmem, size = 0x9000, scoped, tag = 'internal scratch']
  #allocation2 [shape = 'f32[128,32]{1,0:T(8,128)}', space=vmem, size = 0x10000, scoped, tag = 'scratch operand']
  %s0 = inlined_call_operand.vmem [shape: f32[128,128], index: 0, kind: input, shape index: {}]
  %s1 = inlined_call_operand.vmem [shape: f32[128,32], index: 1, kind: input, shape index: {}]
  %s2 = inlined_call_operand.vmem [shape: f32[1,32], index: 2, kind: input, shape index: {}]
  %s3 = inlined_call_operand.hbm [shape: f32[32,128], index: 3, kind: input, shape index: {}]
  %s4 = inlined_call_operand.vmem [shape: f32[128,128], index: 4, kind: output, shape index: {}]
  %s5 = sld [smem:[#allocation0]]
  $region38: #{gcn_forward.4} parent=0
    _
  %s7 = ssub.s32 1, %s5
  %s8 = scalar_select 0, %s7, %s5
  $region1: #{gcn_forward.4} parent=0
    #allocation3 [shape = 'u8[16384]{0}', space=vmem, size = 0x4000, scoped, tag = 'input window, operand 3, single buffered']
    #allocation4 [shape = 's32[1]{0}', space=sflag, size = 0x4, scoped, tag = 'scoped memory for gcn_forward.4']
    %9 = vsyncpa [#allocation4], 0
    // Predicated region
    $region2: #{gcn_forward.4} parent=1 // pred_check
      _
    $region3: #{gcn_forward.4} parent=1 // pred_check_branch
      %11 = sbr.rel (0) target = $region5
    $region4: #{gcn_forward.4} parent=1 // pred_region
      _
    $region5: #{gcn_forward.4} parent=1 // pred_fallthru
      _
    // Predicated region
    $region6: #{gcn_forward.4} parent=1 // pred_check
      _
    $region7: #{gcn_forward.4} parent=1 // pred_check_branch
      %13 = sbr.rel (0) target = $region9
    $region8: #{gcn_forward.4} parent=1 // pred_region
      _
    $region9: #{gcn_forward.4} parent=1 // pred_fallthru
      _
    // Predicated region
    $region10: #{gcn_forward.4} parent=1 // pred_check
      _
    $region11: #{gcn_forward.4} parent=1 // pred_check_branch
      %15 = sbr.rel (0) target = $region13
    $region12: #{gcn_forward.4} parent=1 // pred_region
      _
    $region13: #{gcn_forward.4} parent=1 // pred_fallthru
      _
    // Predicated region
    $region14: #{gcn_forward.4} parent=1 // pred_check
      _
    $region15: #{gcn_forward.4} parent=1 // pred_check_branch
      %17 = sbr.rel (0) target = $region17
    $region16: #{gcn_forward.4} parent=1 // pred_region
      %19 = vsyncadd [#allocation4], 0
      %s20 = sshll.u32 %s3, 4
      %s21 = int_to_ptr.hbm [resolvable:$true] %s20
      %s22 = sshll.u32 [#allocation3], 4
      %s23 = int_to_ptr.vmem [resolvable:$true] %s22
      %28 = dma.hbm_to_vmem [thread:$0]  %s21, 512, %s23, [#allocation4], 128, 128, 8
    $region17: #{gcn_forward.4} parent=1 // pred_fallthru
      _
    // Predicated region
    $region18: #{gcn_forward.4} parent=1 // pred_check
      _
    $region19: #{gcn_forward.4} parent=1 // pred_check_branch
      %30 = sbr.rel (0) target = $region21
    $region20: #{gcn_forward.4} parent=1 // pred_region
      %32 = dma.done [#allocation4], 512
    $region21: #{gcn_forward.4} parent=1 // pred_fallthru
      _
    %p33 = scmp.eq.s32.totalorder 0, 0
    // Predicated region
    $region22: #{gcn_forward.4} parent=1 // pred_check
      %p34 = pneg %p33
    $region23: #{gcn_forward.4} parent=1 // pred_check_branch
      %36 = sbr.rel (%p34) target = $region25
    $region24: #{gcn_forward.4} parent=1 // pred_region
      %vm37 = vcmask 261120
      %38 = vst.msk [vmem:[#allocation2] sm:$0xff] %vm37, 0.0
      %39 = vst.msk [vmem:[#allocation2 + $0x8] sm:$0xff] %vm37, 0.0
      %40 = vst.msk [vmem:[#allocation2 + $0x10] sm:$0xff] %vm37, 0.0
      %41 = vst.msk [vmem:[#allocation2 + $0x18] sm:$0xff] %vm37, 0.0
      %42 = vst.msk [vmem:[#allocation2 + $0x20] sm:$0xff] %vm37, 0.0
      %43 = vst.msk [vmem:[#allocation2 + $0x28] sm:$0xff] %vm37, 0.0
      %44 = vst.msk [vmem:[#allocation2 + $0x30] sm:$0xff] %vm37, 0.0
      %45 = vst.msk [vmem:[#allocation2 + $0x38] sm:$0xff] %vm37, 0.0
      %46 = vst.msk [vmem:[#allocation2 + $0x40] sm:$0xff] %vm37, 0.0
      %47 = vst.msk [vmem:[#allocation2 + $0x48] sm:$0xff] %vm37, 0.0
      %48 = vst.msk [vmem:[#allocation2 + $0x50] sm:$0xff] %vm37, 0.0
      %49 = vst.msk [vmem:[#allocation2 + $0x58] sm:$0xff] %vm37, 0.0
      %50 = vst.msk [vmem:[#allocation2 + $0x60] sm:$0xff] %vm37, 0.0
      %51 = vst.msk [vmem:[#allocation2 + $0x68] sm:$0xff] %vm37, 0.0
      %52 = vst.msk [vmem:[#allocation2 + $0x70] sm:$0xff] %vm37, 0.0
      %53 = vst.msk [vmem:[#allocation2 + $0x78] sm:$0xff] %vm37, 0.0
    $region25: #{gcn_forward.4} parent=1 // pred_fallthru
      _
    %v54 = vld [vmem:[#allocation2] sm:$0xff]
    %v55 = vld [vmem:[#allocation2 + $0x8] sm:$0xff]
    %v56 = vld [vmem:[#allocation2 + $0x10] sm:$0xff]
    %v57 = vld [vmem:[#allocation2 + $0x18] sm:$0xff]
    %v58 = vld [vmem:[#allocation2 + $0x20] sm:$0xff]
    %v59 = vld [vmem:[#allocation2 + $0x28] sm:$0xff]
    %v60 = vld [vmem:[#allocation2 + $0x30] sm:$0xff]
    %v61 = vld [vmem:[#allocation2 + $0x38] sm:$0xff]
    %v62 = vld [vmem:[#allocation2 + $0x40] sm:$0xff]
    %v63 = vld [vmem:[#allocation2 + $0x48] sm:$0xff]
    %v64 = vld [vmem:[#allocation2 + $0x50] sm:$0xff]
    %v65 = vld [vmem:[#allocation2 + $0x58] sm:$0xff]
    %v66 = vld [vmem:[#allocation2 + $0x60] sm:$0xff]
    %v67 = vld [vmem:[#allocation2 + $0x68] sm:$0xff]
    %v68 = vld [vmem:[#allocation2 + $0x70] sm:$0xff]
    %v69 = vld [vmem:[#allocation2 + $0x78] sm:$0xff]
    %v70 = vld [vmem:[%s0] sm:$0xff]
    %v71 = vld [vmem:[%s0 + $0x8] sm:$0xff]
    %v72 = vld [vmem:[%s0 + $0x10] sm:$0xff]
    %v73 = vld [vmem:[%s0 + $0x18] sm:$0xff]
    %v74 = vld [vmem:[%s0 + $0x20] sm:$0xff]
    %v75 = vld [vmem:[%s0 + $0x28] sm:$0xff]
    %v76 = vld [vmem:[%s0 + $0x30] sm:$0xff]
    %v77 = vld [vmem:[%s0 + $0x38] sm:$0xff]
    %v78 = vld [vmem:[%s0 + $0x40] sm:$0xff]
    %v79 = vld [vmem:[%s0 + $0x48] sm:$0xff]
    %v80 = vld [vmem:[%s0 + $0x50] sm:$0xff]
    %v81 = vld [vmem:[%s0 + $0x58] sm:$0xff]
    %v82 = vld [vmem:[%s0 + $0x60] sm:$0xff]
    %v83 = vld [vmem:[%s0 + $0x68] sm:$0xff]
    %v84 = vld [vmem:[%s0 + $0x70] sm:$0xff]
    %v85 = vld [vmem:[%s0 + $0x78] sm:$0xff]
    %v86 = vld [vmem:[%s1] sm:$0xff]
    %v87 = vld [vmem:[%s1 + $0x8] sm:$0xff]
    %v88 = vld [vmem:[%s1 + $0x10] sm:$0xff]
    %v89 = vld [vmem:[%s1 + $0x18] sm:$0xff]
    %v90 = vld [vmem:[%s1 + $0x20] sm:$0xff]
    %v91 = vld [vmem:[%s1 + $0x28] sm:$0xff]
    %v92 = vld [vmem:[%s1 + $0x30] sm:$0xff]
    %v93 = vld [vmem:[%s1 + $0x38] sm:$0xff]
    %v94 = vld [vmem:[%s1 + $0x40] sm:$0xff]
    %v95 = vld [vmem:[%s1 + $0x48] sm:$0xff]
    %v96 = vld [vmem:[%s1 + $0x50] sm:$0xff]
    %v97 = vld [vmem:[%s1 + $0x58] sm:$0xff]
    %v98 = vld [vmem:[%s1 + $0x60] sm:$0xff]
    %v99 = vld [vmem:[%s1 + $0x68] sm:$0xff]
    %v100 = vld [vmem:[%s1 + $0x70] sm:$0xff]
    %v101 = vld [vmem:[%s1 + $0x78] sm:$0xff]
    %102 = vmatpush.msra.mxu0 %v101
    %103 = vmatpush.msra.mxu0 %v100
    %104 = vmatpush.msra.mxu0 %v99
    %105 = vmatpush.msra.mxu0 %v98
    %106 = vmatpush.msra.mxu0 %v97
    %107 = vmatpush.msra.mxu0 %v96
    %108 = vmatpush.msra.mxu0 %v95
    %109 = vmatpush.msra.mxu0 %v94
    %110 = vmatpush.msra.mxu0 %v93
    %111 = vmatpush.msra.mxu0 %v92
    %112 = vmatpush.msra.mxu0 %v91
    %113 = vmatpush.msra.mxu0 %v90
    %114 = vmatpush.msra.mxu0 %v89
    %115 = vmatpush.msra.mxu0 %v88
    %116 = vmatpush.msra.mxu0 %v87
    %117 = vmatpush.msra.mxu0 %v86
    %118 = vmatmul.f32.gmra.mxu0 %v70
    %v119 = vpop.f32.mrf.mxu0
    %v120 = vadd.f32 0.0, %v119
    %121 = vmatmul.f32.gmra.mxu0 %v71
    %v122 = vpop.f32.mrf.mxu0
    %v123 = vadd.f32 0.0, %v122
    %124 = vmatmul.f32.gmra.mxu0 %v72
    %v125 = vpop.f32.mrf.mxu0
    %v126 = vadd.f32 0.0, %v125
    %127 = vmatmul.f32.gmra.mxu0 %v73
    %v128 = vpop.f32.mrf.mxu0
    %v129 = vadd.f32 0.0, %v128
    %130 = vmatmul.f32.gmra.mxu0 %v74
    %v131 = vpop.f32.mrf.mxu0
    %v132 = vadd.f32 0.0, %v131
    %133 = vmatmul.f32.gmra.mxu0 %v75
    %v134 = vpop.f32.mrf.mxu0
    %v135 = vadd.f32 0.0, %v134
    %136 = vmatmul.f32.gmra.mxu0 %v76
    %v137 = vpop.f32.mrf.mxu0
    %v138 = vadd.f32 0.0, %v137
    %139 = vmatmul.f32.gmra.mxu0 %v77
    %v140 = vpop.f32.mrf.mxu0
    %v141 = vadd.f32 0.0, %v140
    %142 = vmatmul.f32.gmra.mxu0 %v78
    %v143 = vpop.f32.mrf.mxu0
    %v144 = vadd.f32 0.0, %v143
    %145 = vmatmul.f32.gmra.mxu0 %v79
    %v146 = vpop.f32.mrf.mxu0
    %v147 = vadd.f32 0.0, %v146
    %148 = vmatmul.f32.gmra.mxu0 %v80
    %v149 = vpop.f32.mrf.mxu0
    %v150 = vadd.f32 0.0, %v149
    %151 = vmatmul.f32.gmra.mxu0 %v81
    %v152 = vpop.f32.mrf.mxu0
    %v153 = vadd.f32 0.0, %v152
    %154 = vmatmul.f32.gmra.mxu0 %v82
    %v155 = vpop.f32.mrf.mxu0
    %v156 = vadd.f32 0.0, %v155
    %157 = vmatmul.f32.gmra.mxu0 %v83
    %v158 = vpop.f32.mrf.mxu0
    %v159 = vadd.f32 0.0, %v158
    %160 = vmatmul.f32.gmra.mxu0 %v84
    %v161 = vpop.f32.mrf.mxu0
    %v162 = vadd.f32 0.0, %v161
    %163 = vmatmul.f32.gmra.mxu0 %v85
    %v164 = vpop.f32.mrf.mxu0
    %v165 = vadd.f32 0.0, %v164
    %166 = vdwg.mxu0
    %v167 = vadd.f32 %v54, %v120
    %v168 = vadd.f32 %v55, %v123
    %v169 = vadd.f32 %v56, %v126
    %v170 = vadd.f32 %v57, %v129
    %v171 = vadd.f32 %v58, %v132
    %v172 = vadd.f32 %v59, %v135
    %v173 = vadd.f32 %v60, %v138
    %v174 = vadd.f32 %v61, %v141
    %v175 = vadd.f32 %v62, %v144
    %v176 = vadd.f32 %v63, %v147
    %v177 = vadd.f32 %v64, %v150
    %v178 = vadd.f32 %v65, %v153
    %v179 = vadd.f32 %v66, %v156
    %v180 = vadd.f32 %v67, %v159
    %v181 = vadd.f32 %v68, %v162
    %v182 = vadd.f32 %v69, %v165
    %vm183 = vcmask 261120
    %184 = vst.msk [vmem:[#allocation2] sm:$0xff] %vm183, %v167
    %185 = vst.msk [vmem:[#allocation2 + $0x8] sm:$0xff] %vm183, %v168
    %186 = vst.msk [vmem:[#allocation2 + $0x10] sm:$0xff] %vm183, %v169
    %187 = vst.msk [vmem:[#allocation2 + $0x18] sm:$0xff] %vm183, %v170
    %188 = vst.msk [vmem:[#allocation2 + $0x20] sm:$0xff] %vm183, %v171
    %189 = vst.msk [vmem:[#allocation2 + $0x28] sm:$0xff] %vm183, %v172
    %190 = vst.msk [vmem:[#allocation2 + $0x30] sm:$0xff] %vm183, %v173
    %191 = vst.msk [vmem:[#allocation2 + $0x38] sm:$0xff] %vm183, %v174
    %192 = vst.msk [vmem:[#allocation2 + $0x40] sm:$0xff] %vm183, %v175
    %193 = vst.msk [vmem:[#allocation2 + $0x48] sm:$0xff] %vm183, %v176
    %194 = vst.msk [vmem:[#allocation2 + $0x50] sm:$0xff] %vm183, %v177
    %195 = vst.msk [vmem:[#allocation2 + $0x58] sm:$0xff] %vm183, %v178
    %196 = vst.msk [vmem:[#allocation2 + $0x60] sm:$0xff] %vm183, %v179
    %197 = vst.msk [vmem:[#allocation2 + $0x68] sm:$0xff] %vm183, %v180
    %198 = vst.msk [vmem:[#allocation2 + $0x70] sm:$0xff] %vm183, %v181
    %199 = vst.msk [vmem:[#allocation2 + $0x78] sm:$0xff] %vm183, %v182
    // Predicated region
    $region26: #{gcn_forward.4} parent=1 // pred_check
      %p200 = pneg %p33
    $region27: #{gcn_forward.4} parent=1 // pred_check_branch
      %202 = sbr.rel (%p200) target = $region29
    $region28: #{gcn_forward.4} parent=1 // pred_region
      %v203 = vld [vmem:[#allocation2] sm:$0xff]
      %v204 = vld [vmem:[#allocation2 + $0x8] sm:$0xff]
      %v205 = vld [vmem:[#allocation2 + $0x10] sm:$0xff]
      %v206 = vld [vmem:[#allocation2 + $0x18] sm:$0xff]
      %v207 = vld [vmem:[#allocation2 + $0x20] sm:$0xff]
      %v208 = vld [vmem:[#allocation2 + $0x28] sm:$0xff]
      %v209 = vld [vmem:[#allocation2 + $0x30] sm:$0xff]
      %v210 = vld [vmem:[#allocation2 + $0x38] sm:$0xff]
      %v211 = vld [vmem:[#allocation2 + $0x40] sm:$0xff]
      %v212 = vld [vmem:[#allocation2 + $0x48] sm:$0xff]
      %v213 = vld [vmem:[#allocation2 + $0x50] sm:$0xff]
      %v214 = vld [vmem:[#allocation2 + $0x58] sm:$0xff]
      %v215 = vld [vmem:[#allocation2 + $0x60] sm:$0xff]
      %v216 = vld [vmem:[#allocation2 + $0x68] sm:$0xff]
      %v217 = vld [vmem:[#allocation2 + $0x70] sm:$0xff]
      %v218 = vld [vmem:[#allocation2 + $0x78] sm:$0xff]
      %v219 = vld [vmem:[%s2] sm:$0x1]
      %v221 = vperm.slane %v219, 0
      %v223 = vadd.f32 %v203, %v221
      %v224 = vadd.f32 %v204, %v221
      %v225 = vadd.f32 %v205, %v221
      %v226 = vadd.f32 %v206, %v221
      %v227 = vadd.f32 %v207, %v221
      %v228 = vadd.f32 %v208, %v221
      %v229 = vadd.f32 %v209, %v221
      %v230 = vadd.f32 %v210, %v221
      %v231 = vadd.f32 %v211, %v221
      %v232 = vadd.f32 %v212, %v221
      %v233 = vadd.f32 %v213, %v221
      %v234 = vadd.f32 %v214, %v221
      %v235 = vadd.f32 %v215, %v221
      %v236 = vadd.f32 %v216, %v221
      %v237 = vadd.f32 %v217, %v221
      %v238 = vadd.f32 %v218, %v221
      %v239 = vmax.f32 %v223, 0.0
      %v240 = vmax.f32 %v224, 0.0
      %v241 = vmax.f32 %v225, 0.0
      %v242 = vmax.f32 %v226, 0.0
      %v243 = vmax.f32 %v227, 0.0
      %v244 = vmax.f32 %v228, 0.0
      %v245 = vmax.f32 %v229, 0.0
      %v246 = vmax.f32 %v230, 0.0
      %v247 = vmax.f32 %v231, 0.0
      %v248 = vmax.f32 %v232, 0.0
      %v249 = vmax.f32 %v233, 0.0
      %v250 = vmax.f32 %v234, 0.0
      %v251 = vmax.f32 %v235, 0.0
      %v252 = vmax.f32 %v236, 0.0
      %v253 = vmax.f32 %v237, 0.0
      %v254 = vmax.f32 %v238, 0.0
      %v255 = vld [vmem:[#allocation3] sm:$0xff]
      %v256 = vld [vmem:[#allocation3 + $0x8] sm:$0xff]
      %v257 = vld [vmem:[#allocation3 + $0x10] sm:$0xff]
      %v258 = vld [vmem:[#allocation3 + $0x18] sm:$0xff]
      %v260 = vsel %vm183, %v239, 0
      %v263 = vsel %vm183, %v240, 0
      %v266 = vsel %vm183, %v241, 0
      %v269 = vsel %vm183, %v242, 0
      %v272 = vsel %vm183, %v243, 0
      %v275 = vsel %vm183, %v244, 0
      %v278 = vsel %vm183, %v245, 0
      %v281 = vsel %vm183, %v246, 0
      %v284 = vsel %vm183, %v247, 0
      %v287 = vsel %vm183, %v248, 0
      %v290 = vsel %vm183, %v249, 0
      %v293 = vsel %vm183, %v250, 0
      %v296 = vsel %vm183, %v251, 0
      %v299 = vsel %vm183, %v252, 0
      %v302 = vsel %vm183, %v253, 0
      %v305 = vsel %vm183, %v254, 0
      %307 = vmatpush.msra.mxu0 0.0
      %308 = vmatpush.msra.mxu0 0.0
      %309 = vmatpush.msra.mxu0 0.0
      %310 = vmatpush.msra.mxu0 0.0
      %311 = vmatpush.msra.mxu0 0.0
      %312 = vmatpush.msra.mxu0 0.0
      %313 = vmatpush.msra.mxu0 0.0
      %314 = vmatpush.msra.mxu0 0.0
      %315 = vmatpush.msra.mxu0 0.0
      %316 = vmatpush.msra.mxu0 0.0
      %317 = vmatpush.msra.mxu0 0.0
      %318 = vmatpush.msra.mxu0 0.0
      %319 = vmatpush.msra.mxu0 %v258
      %320 = vmatpush.msra.mxu0 %v257
      %321 = vmatpush.msra.mxu0 %v256
      %322 = vmatpush.msra.mxu0 %v255
      %323 = vmatmul.f32.gmra.mxu0 %v260
      %v324 = vpop.f32.mrf.mxu0
      %v325 = vadd.f32 0.0, %v324
      %326 = vmatmul.f32.gmra.mxu0 %v263
      %v327 = vpop.f32.mrf.mxu0
      %v328 = vadd.f32 0.0, %v327
      %329 = vmatmul.f32.gmra.mxu0 %v266
      %v330 = vpop.f32.mrf.mxu0
      %v331 = vadd.f32 0.0, %v330
      %332 = vmatmul.f32.gmra.mxu0 %v269
      %v333 = vpop.f32.mrf.mxu0
      %v334 = vadd.f32 0.0, %v333
      %335 = vmatmul.f32.gmra.mxu0 %v272
      %v336 = vpop.f32.mrf.mxu0
      %v337 = vadd.f32 0.0, %v336
      %338 = vmatmul.f32.gmra.mxu0 %v275
      %v339 = vpop.f32.mrf.mxu0
      %v340 = vadd.f32 0.0, %v339
      %341 = vmatmul.f32.gmra.mxu0 %v278
      %v342 = vpop.f32.mrf.mxu0
      %v343 = vadd.f32 0.0, %v342
      %344 = vmatmul.f32.gmra.mxu0 %v281
      %v345 = vpop.f32.mrf.mxu0
      %v346 = vadd.f32 0.0, %v345
      %347 = vmatmul.f32.gmra.mxu0 %v284
      %v348 = vpop.f32.mrf.mxu0
      %v349 = vadd.f32 0.0, %v348
      %350 = vmatmul.f32.gmra.mxu0 %v287
      %v351 = vpop.f32.mrf.mxu0
      %v352 = vadd.f32 0.0, %v351
      %353 = vmatmul.f32.gmra.mxu0 %v290
      %v354 = vpop.f32.mrf.mxu0
      %v355 = vadd.f32 0.0, %v354
      %356 = vmatmul.f32.gmra.mxu0 %v293
      %v357 = vpop.f32.mrf.mxu0
      %v358 = vadd.f32 0.0, %v357
      %359 = vmatmul.f32.gmra.mxu0 %v296
      %v360 = vpop.f32.mrf.mxu0
      %v361 = vadd.f32 0.0, %v360
      %362 = vmatmul.f32.gmra.mxu0 %v299
      %v363 = vpop.f32.mrf.mxu0
      %v364 = vadd.f32 0.0, %v363
      %365 = vmatmul.f32.gmra.mxu0 %v302
      %v366 = vpop.f32.mrf.mxu0
      %v367 = vadd.f32 0.0, %v366
      %368 = vmatmul.f32.gmra.mxu0 %v305
      %v369 = vpop.f32.mrf.mxu0
      %v370 = vadd.f32 0.0, %v369
      %371 = vdwg.mxu0
      %372 = vst [vmem:[%s4] sm:$0xff] %v325
      %373 = vst [vmem:[%s4 + $0x8] sm:$0xff] %v328
      %374 = vst [vmem:[%s4 + $0x10] sm:$0xff] %v331
      %375 = vst [vmem:[%s4 + $0x18] sm:$0xff] %v334
      %376 = vst [vmem:[%s4 + $0x20] sm:$0xff] %v337
      %377 = vst [vmem:[%s4 + $0x28] sm:$0xff] %v340
      %378 = vst [vmem:[%s4 + $0x30] sm:$0xff] %v343
      %379 = vst [vmem:[%s4 + $0x38] sm:$0xff] %v346
      %380 = vst [vmem:[%s4 + $0x40] sm:$0xff] %v349
      %381 = vst [vmem:[%s4 + $0x48] sm:$0xff] %v352
      %382 = vst [vmem:[%s4 + $0x50] sm:$0xff] %v355
      %383 = vst [vmem:[%s4 + $0x58] sm:$0xff] %v358
      %384 = vst [vmem:[%s4 + $0x60] sm:$0xff] %v361
      %385 = vst [vmem:[%s4 + $0x68] sm:$0xff] %v364
      %386 = vst [vmem:[%s4 + $0x70] sm:$0xff] %v367
      %387 = vst [vmem:[%s4 + $0x78] sm:$0xff] %v370
    $region29: #{gcn_forward.4} parent=1 // pred_fallthru
      _
    // Predicated region
    $region30: #{gcn_forward.4} parent=1 // pred_check
      _
    $region31: #{gcn_forward.4} parent=1 // pred_check_branch
      %389 = sbr.rel (0) target = $region33
    $region32: #{gcn_forward.4} parent=1 // pred_region
      _
    $region33: #{gcn_forward.4} parent=1 // pred_fallthru
      _
    // Predicated region
    $region34: #{gcn_forward.4} parent=1 // pred_check
      _
    $region35: #{gcn_forward.4} parent=1 // pred_check_branch
      %391 = sbr.rel (0) target = $region37
    $region36: #{gcn_forward.4} parent=1 // pred_region
      _
    $region37: #{gcn_forward.4} parent=1 // pred_fallthru
      _
    %392 = vsyncpa [#allocation4], 1

</llo_original>
